<compile_context>
chip_gen: v6e
topology: v6e:2x2x1
jax: 0.10.0
libtpu: 0.0.40
codegen_flags: <defaults>
</compile_context>

<pallas_src>
import jax
import jax.numpy as jnp
from jax.experimental import pallas as pl
from jax.experimental.pallas import tpu as pltpu


def _round_up(n, m):
    return ((n + m - 1) // m) * m


# ------------------------------- kernel --------------------------------------

def mlp_kernel(x_ref,
               w1_ref, b1_ref,
               w2_ref, b2_ref,
               w3_ref, b3_ref,
               w4_ref, b4_ref,
               w5_ref, b5_ref,
               o_ref):
    cdt = w1_ref.dtype  # dtype fed to the MXU (bf16 by default)

    def hidden_layer(h, w_ref, b_ref):
        acc = jnp.dot(h, w_ref[...], preferred_element_type=jnp.float32)
        return jnp.maximum(acc + b_ref[...], 0.0).astype(cdt)

    h = x_ref[...].astype(cdt)          # f32 in HBM -> bf16 for the MXU
    h = hidden_layer(h, w1_ref, b1_ref)
    h = hidden_layer(h, w2_ref, b2_ref)
    h = hidden_layer(h, w3_ref, b3_ref)
    h = hidden_layer(h, w4_ref, b4_ref)

    logits = jnp.dot(h, w5_ref[...], preferred_element_type=jnp.float32) + b5_ref[...]
    o_ref[...] = jax.nn.sigmoid(logits)


# ------------------------------ wrapper ---------------------------------------

def _pick_bm(B):
    """Batch tile: one step for small B; otherwise the largest tile in
    {1024, 512, 256, 128} that divides the 8-rounded batch (>=2 steps)."""
    B8 = _round_up(B, 8)
    if B8 <= 512:
        return B8
    for bm in (1024, 512, 256, 128):
        if bm < B8 and B8 % bm == 0:
            return bm
    return 1024  # ragged large batch: pad up to a multiple of 1024


def _vmem_limit_bytes(bm, flat, din, dout):
    """Footprint-sized VMEM budget, capped at 75% of this generation's VMEM."""
    try:
        cap = int(pltpu.get_tpu_info().vmem_capacity_bytes)
    except Exception:  # info query unavailable on this build: assume v7x (64 MiB)
        cap = 64 * 1024 * 1024
    weight_bytes = sum(int(a.size) * int(a.dtype.itemsize) for a in flat)
    widest = max([din, dout] + [int(a.shape[1]) for a in flat[0::2]])
    io_bytes = 2 * bm * din * 4 + 2 * bm * dout * 4   # double-buffered x / out tiles
    inter_bytes = 4 * bm * widest * 4                 # in-flight activation headroom (f32)
    need = 2 * weight_bytes + io_bytes + inter_bytes
    return int(min(max(2 * need, 16 * 1024 * 1024), int(0.75 * cap)))


def _forward_impl(x, flat):
    B, din = x.shape
    dout = flat[-2].shape[1]

    bm = _pick_bm(B)
    Bp = _round_up(B, bm)

    xp = x.astype(jnp.float32)
    if Bp != B:
        xp = jnp.pad(xp, ((0, Bp - B), (0, 0)))  # only materialized when needed

    # x tile: (bm, din) — last dim equals the full array dim, so no lane padding.
    in_specs = [pl.BlockSpec((bm, din), lambda i: (i, 0))]
    # Weights / biases: full-array blocks, grid-invariant (fetched once).
    for a in flat:
        in_specs.append(pl.BlockSpec(a.shape, lambda i: (0, 0)))

    out = pl.pallas_call(
        mlp_kernel,
        out_shape=jax.ShapeDtypeStruct((Bp, dout), jnp.float32),
        grid_spec=pltpu.PrefetchScalarGridSpec(
            num_scalar_prefetch=0,
            grid=(Bp // bm,),
            in_specs=in_specs,
            out_specs=pl.BlockSpec((bm, dout), lambda i: (i, 0)),
        ),
        compiler_params=pltpu.CompilerParams(
            dimension_semantics=("parallel",),
            vmem_limit_bytes=_vmem_limit_bytes(bm, flat, din, dout)),
    )(xp, *flat)

    return out[:B] if Bp != B else out


def make_dnn_forward(params, compute_dtype=jnp.bfloat16):
    """One-time param prep (layout + dtype), returns a jitted forward(x)."""
    flat = []
    for (W, b) in params:                                   # W stored (in, out)
        flat.append(jnp.asarray(W, compute_dtype))
        flat.append(jnp.asarray(b, jnp.float32).reshape(1, -1))
    flat = tuple(flat)
    return jax.jit(lambda x: _forward_impl(x, flat))


def dnn_forward(x, params, compute_dtype=jnp.bfloat16):
    """Convenience one-shot call (prefer make_dnn_forward to amortize prep/jit)."""
    return make_dnn_forward(params, compute_dtype)(x)


# ----------------------------- init + references -----------------------------

def xavier_uniform(key, fan_in, fan_out):
    # Matches torch.nn.init.xavier_uniform_ (gain=1).
    limit = jnp.sqrt(6.0 / (fan_in + fan_out))
    return jax.random.uniform(key, (fan_in, fan_out), jnp.float32, -limit, limit)


def make_params(key, din, dout, w1, w2, w3, w4):
    dims = [din, w1, w2, w3, w4, dout]
    params = []
    for i in range(5):
        key, kw, kb = jax.random.split(key, 3)
        fan_in, fan_out = dims[i], dims[i + 1]
        W = xavier_uniform(kw, fan_in, fan_out)              # stored (in, out)
        bound = 1.0 / jnp.sqrt(jnp.float32(fan_in))
        b = jax.random.uniform(kb, (fan_out,), jnp.float32, -bound, bound)
        params.append((W, b))
    return params


def reference_forward_f32(x, params):
    h = x.astype(jnp.float32)
    for i, (W, b) in enumerate(params):
        h = h @ W + b
        h = jnp.maximum(h, 0.0) if i < len(params) - 1 else jax.nn.sigmoid(h)
    return h


def reference_forward_matched(x, params, compute_dtype=jnp.bfloat16):
    # Emulates the in-kernel bf16-matmul / f32-accumulate path.
    h = x.astype(compute_dtype)
    n = len(params)
    for i, (W, b) in enumerate(params):
        acc = jnp.dot(h, W.astype(compute_dtype),
                      preferred_element_type=jnp.float32) + b
        if i < n - 1:
            h = jnp.maximum(acc, 0.0).astype(compute_dtype)
        else:
            h = jax.nn.sigmoid(acc)
    return h


if __name__ == "__main__":
    key = jax.random.PRNGKey(0)

    # Small shapes consistent with dnn_class(din, dout, w1, w2, w3, w4).
    B, din, dout = 16, 32, 8
    w1, w2, w3, w4 = 64, 64, 32, 32

    kx, kp, kx2, kx3 = jax.random.split(key, 4)
    x = jax.random.normal(kx, (B, din), jnp.float32)
    params = make_params(kp, din, dout, w1, w2, w3, w4)

    forward = make_dnn_forward(params)   # prep + jit once, reuse across calls

    out = jax.block_until_ready(forward(x))
    assert out.shape == (B, dout)
    assert bool(jnp.all(jnp.isfinite(out)))
    assert float(jnp.max(jnp.abs(out - reference_forward_matched(x, params)))) < 2e-3
    assert float(jnp.max(jnp.abs(out - reference_forward_f32(x, params)))) < 5e-2

    # Non-multiple-of-8 batch: exercises the batch-pad + slice path.
    B2 = 100
    x2 = jax.random.normal(kx2, (B2, din), jnp.float32)
    out2 = jax.block_until_ready(forward(x2))
    assert out2.shape == (B2, dout)
    assert float(jnp.max(jnp.abs(out2 - reference_forward_matched(x2, params)))) < 2e-3

    # Larger batch: exercises the multi-step "parallel" grid (bm=512, 3 steps).
    B3 = 1536
    x3 = jax.random.normal(kx3, (B3, din), jnp.float32)
    out3 = jax.block_until_ready(forward(x3))
    assert out3.shape == (B3, dout)
    assert float(jnp.max(jnp.abs(out3 - reference_forward_matched(x3, params)))) < 2e-3

    print("KERNEL_OK")
</pallas_src>

<mosaic_0001>
module attributes {stable_mosaic.version = 11 : i64} {
  func.func @mlp_kernel(%arg0: i32, %arg1: memref<16x32xf32, #tpu.memory_space<vmem>>, %arg2: memref<32x64xbf16, #tpu.memory_space<vmem>>, %arg3: memref<1x64xf32, #tpu.memory_space<vmem>>, %arg4: memref<64x64xbf16, #tpu.memory_space<vmem>>, %arg5: memref<1x64xf32, #tpu.memory_space<vmem>>, %arg6: memref<64x32xbf16, #tpu.memory_space<vmem>>, %arg7: memref<1x32xf32, #tpu.memory_space<vmem>>, %arg8: memref<32x32xbf16, #tpu.memory_space<vmem>>, %arg9: memref<1x32xf32, #tpu.memory_space<vmem>>, %arg10: memref<32x8xbf16, #tpu.memory_space<vmem>>, %arg11: memref<1x8xf32, #tpu.memory_space<vmem>>, %arg12: memref<16x8xf32, #tpu.memory_space<vmem>>) attributes {dimension_semantics = [#tpu.dimension_semantics<parallel>], iteration_bounds = array<i64: 1>, scalar_prefetch = 0 : i64, scratch_operands = 0 : i64, tpu.core_type = #tpu.core_type<tc>, window_params = [{transform_indices = @transform_0, window_bounds = array<i64: 16, 32>}, {pipeline_mode = #tpu.pipeline_mode<synchronous>, transform_indices = @transform_1, window_bounds = array<i64: 32, 64>}, {pipeline_mode = #tpu.pipeline_mode<synchronous>, transform_indices = @transform_2, window_bounds = array<i64: 1, 64>}, {pipeline_mode = #tpu.pipeline_mode<synchronous>, transform_indices = @transform_3, window_bounds = array<i64: 64, 64>}, {pipeline_mode = #tpu.pipeline_mode<synchronous>, transform_indices = @transform_4, window_bounds = array<i64: 1, 64>}, {pipeline_mode = #tpu.pipeline_mode<synchronous>, transform_indices = @transform_5, window_bounds = array<i64: 64, 32>}, {pipeline_mode = #tpu.pipeline_mode<synchronous>, transform_indices = @transform_6, window_bounds = array<i64: 1, 32>}, {pipeline_mode = #tpu.pipeline_mode<synchronous>, transform_indices = @transform_7, window_bounds = array<i64: 32, 32>}, {pipeline_mode = #tpu.pipeline_mode<synchronous>, transform_indices = @transform_8, window_bounds = array<i64: 1, 32>}, {pipeline_mode = #tpu.pipeline_mode<synchronous>, transform_indices = @transform_9, window_bounds = array<i64: 32, 8>}, {pipeline_mode = #tpu.pipeline_mode<synchronous>, transform_indices = @transform_10, window_bounds = array<i64: 1, 8>}, {transform_indices = @transform_11, window_bounds = array<i64: 16, 8>}]} {
    %c0 = arith.constant 0 : index
    %c0_0 = arith.constant 0 : index
    %0 = vector.load %arg1[%c0, %c0_0] : memref<16x32xf32, #tpu.memory_space<vmem>>, vector<16x32xf32>
    %1 = arith.truncf %0 : vector<16x32xf32> to vector<16x32xbf16>
    %c0_1 = arith.constant 0 : index
    %c0_2 = arith.constant 0 : index
    %2 = vector.load %arg2[%c0_1, %c0_2] : memref<32x64xbf16, #tpu.memory_space<vmem>>, vector<32x64xbf16>
    %cst = arith.constant dense<0.000000e+00> : vector<16x64xf32>
    %3 = tpu.matmul %1, %2, %cst {dimension_numbers = #tpu.dot_dimension_numbers<[1], [0], [0], [1], [0, 0, 1, 1], [], []>} : vector<16x32xbf16>, vector<32x64xbf16>, vector<16x64xf32> -> vector<16x64xf32>
    %c0_3 = arith.constant 0 : index
    %c0_4 = arith.constant 0 : index
    %4 = vector.load %arg3[%c0_3, %c0_4] : memref<1x64xf32, #tpu.memory_space<vmem>>, vector<1x64xf32>
    %5 = vector.broadcast %4 : vector<1x64xf32> to vector<16x64xf32>
    %6 = arith.addf %3, %5 : vector<16x64xf32>
    %cst_5 = arith.constant 0.000000e+00 : f32
    %7 = vector.broadcast %cst_5 : f32 to vector<16x64xf32>
    %8 = arith.maximumf %6, %7 : vector<16x64xf32>
    %9 = arith.truncf %8 : vector<16x64xf32> to vector<16x64xbf16>
    %c0_6 = arith.constant 0 : index
    %c0_7 = arith.constant 0 : index
    %10 = vector.load %arg4[%c0_6, %c0_7] : memref<64x64xbf16, #tpu.memory_space<vmem>>, vector<64x64xbf16>
    %cst_8 = arith.constant dense<0.000000e+00> : vector<16x64xf32>
    %11 = tpu.matmul %9, %10, %cst_8 {dimension_numbers = #tpu.dot_dimension_numbers<[1], [0], [0], [1], [0, 0, 1, 1], [], []>} : vector<16x64xbf16>, vector<64x64xbf16>, vector<16x64xf32> -> vector<16x64xf32>
    %c0_9 = arith.constant 0 : index
    %c0_10 = arith.constant 0 : index
    %12 = vector.load %arg5[%c0_9, %c0_10] : memref<1x64xf32, #tpu.memory_space<vmem>>, vector<1x64xf32>
    %13 = vector.broadcast %12 : vector<1x64xf32> to vector<16x64xf32>
    %14 = arith.addf %11, %13 : vector<16x64xf32>
    %cst_11 = arith.constant 0.000000e+00 : f32
    %15 = vector.broadcast %cst_11 : f32 to vector<16x64xf32>
    %16 = arith.maximumf %14, %15 : vector<16x64xf32>
    %17 = arith.truncf %16 : vector<16x64xf32> to vector<16x64xbf16>
    %c0_12 = arith.constant 0 : index
    %c0_13 = arith.constant 0 : index
    %18 = vector.load %arg6[%c0_12, %c0_13] : memref<64x32xbf16, #tpu.memory_space<vmem>>, vector<64x32xbf16>
    %cst_14 = arith.constant dense<0.000000e+00> : vector<16x32xf32>
    %19 = tpu.matmul %17, %18, %cst_14 {dimension_numbers = #tpu.dot_dimension_numbers<[1], [0], [0], [1], [0, 0, 1, 1], [], []>} : vector<16x64xbf16>, vector<64x32xbf16>, vector<16x32xf32> -> vector<16x32xf32>
    %c0_15 = arith.constant 0 : index
    %c0_16 = arith.constant 0 : index
    %20 = vector.load %arg7[%c0_15, %c0_16] : memref<1x32xf32, #tpu.memory_space<vmem>>, vector<1x32xf32>
    %21 = vector.broadcast %20 : vector<1x32xf32> to vector<16x32xf32>
    %22 = arith.addf %19, %21 : vector<16x32xf32>
    %cst_17 = arith.constant 0.000000e+00 : f32
    %23 = vector.broadcast %cst_17 : f32 to vector<16x32xf32>
    %24 = arith.maximumf %22, %23 : vector<16x32xf32>
    %25 = arith.truncf %24 : vector<16x32xf32> to vector<16x32xbf16>
    %c0_18 = arith.constant 0 : index
    %c0_19 = arith.constant 0 : index
    %26 = vector.load %arg8[%c0_18, %c0_19] : memref<32x32xbf16, #tpu.memory_space<vmem>>, vector<32x32xbf16>
    %cst_20 = arith.constant dense<0.000000e+00> : vector<16x32xf32>
    %27 = tpu.matmul %25, %26, %cst_20 {dimension_numbers = #tpu.dot_dimension_numbers<[1], [0], [0], [1], [0, 0, 1, 1], [], []>} : vector<16x32xbf16>, vector<32x32xbf16>, vector<16x32xf32> -> vector<16x32xf32>
    %c0_21 = arith.constant 0 : index
    %c0_22 = arith.constant 0 : index
    %28 = vector.load %arg9[%c0_21, %c0_22] : memref<1x32xf32, #tpu.memory_space<vmem>>, vector<1x32xf32>
    %29 = vector.broadcast %28 : vector<1x32xf32> to vector<16x32xf32>
    %30 = arith.addf %27, %29 : vector<16x32xf32>
    %cst_23 = arith.constant 0.000000e+00 : f32
    %31 = vector.broadcast %cst_23 : f32 to vector<16x32xf32>
    %32 = arith.maximumf %30, %31 : vector<16x32xf32>
    %33 = arith.truncf %32 : vector<16x32xf32> to vector<16x32xbf16>
    %c0_24 = arith.constant 0 : index
    %c0_25 = arith.constant 0 : index
    %34 = vector.load %arg10[%c0_24, %c0_25] : memref<32x8xbf16, #tpu.memory_space<vmem>>, vector<32x8xbf16>
    %cst_26 = arith.constant dense<0.000000e+00> : vector<16x8xf32>
    %35 = tpu.matmul %33, %34, %cst_26 {dimension_numbers = #tpu.dot_dimension_numbers<[1], [0], [0], [1], [0, 0, 1, 1], [], []>} : vector<16x32xbf16>, vector<32x8xbf16>, vector<16x8xf32> -> vector<16x8xf32>
    %c0_27 = arith.constant 0 : index
    %c0_28 = arith.constant 0 : index
    %36 = vector.load %arg11[%c0_27, %c0_28] : memref<1x8xf32, #tpu.memory_space<vmem>>, vector<1x8xf32>
    %37 = vector.broadcast %36 : vector<1x8xf32> to vector<16x8xf32>
    %38 = arith.addf %35, %37 : vector<16x8xf32>
    %39 = arith.negf %38 : vector<16x8xf32>
    %40 = math.exp %39 : vector<16x8xf32>
    %cst_29 = arith.constant 1.000000e+00 : f32
    %41 = vector.broadcast %cst_29 : f32 to vector<16x8xf32>
    %42 = arith.addf %41, %40 : vector<16x8xf32>
    %43 = arith.divf %41, %42 : vector<16x8xf32>
    %c0_30 = arith.constant 0 : index
    %c0_31 = arith.constant 0 : index
    %44 = vector.load %arg12[%c0_30, %c0_31] : memref<16x8xf32, #tpu.memory_space<vmem>>, vector<16x8xf32>
    tpu.vector_store %arg12[%c0_30, %c0_31], %43 {strides = array<i32>} : memref<16x8xf32, #tpu.memory_space<vmem>>, vector<16x8xf32>,
    return
  }
  func.func @transform_0(%arg0: i32) -> (i32, i32) {
    %c0_i32 = arith.constant 0 : i32
    %c0_i32_0 = arith.constant 0 : i32
    return %arg0, %c0_i32 : i32, i32
  }
  func.func @transform_1(%arg0: i32) -> (i32, i32) {
    %c0_i32 = arith.constant 0 : i32
    %c0_i32_0 = arith.constant 0 : i32
    %c0_i32_1 = arith.constant 0 : i32
    return %c0_i32, %c0_i32_0 : i32, i32
  }
  func.func @transform_2(%arg0: i32) -> (i32, i32) {
    %c0_i32 = arith.constant 0 : i32
    %c0_i32_0 = arith.constant 0 : i32
    %c0_i32_1 = arith.constant 0 : i32
    return %c0_i32, %c0_i32_0 : i32, i32
  }
  func.func @transform_3(%arg0: i32) -> (i32, i32) {
    %c0_i32 = arith.constant 0 : i32
    %c0_i32_0 = arith.constant 0 : i32
    %c0_i32_1 = arith.constant 0 : i32
    return %c0_i32, %c0_i32_0 : i32, i32
  }
  func.func @transform_4(%arg0: i32) -> (i32, i32) {
    %c0_i32 = arith.constant 0 : i32
    %c0_i32_0 = arith.constant 0 : i32
    %c0_i32_1 = arith.constant 0 : i32
    return %c0_i32, %c0_i32_0 : i32, i32
  }
  func.func @transform_5(%arg0: i32) -> (i32, i32) {
    %c0_i32 = arith.constant 0 : i32
    %c0_i32_0 = arith.constant 0 : i32
    %c0_i32_1 = arith.constant 0 : i32
    return %c0_i32, %c0_i32_0 : i32, i32
  }
  func.func @transform_6(%arg0: i32) -> (i32, i32) {
    %c0_i32 = arith.constant 0 : i32
    %c0_i32_0 = arith.constant 0 : i32
    %c0_i32_1 = arith.constant 0 : i32
    return %c0_i32, %c0_i32_0 : i32, i32
  }
  func.func @transform_7(%arg0: i32) -> (i32, i32) {
    %c0_i32 = arith.constant 0 : i32
    %c0_i32_0 = arith.constant 0 : i32
    %c0_i32_1 = arith.constant 0 : i32
    return %c0_i32, %c0_i32_0 : i32, i32
  }
  func.func @transform_8(%arg0: i32) -> (i32, i32) {
    %c0_i32 = arith.constant 0 : i32
    %c0_i32_0 = arith.constant 0 : i32
    %c0_i32_1 = arith.constant 0 : i32
    return %c0_i32, %c0_i32_0 : i32, i32
  }
  func.func @transform_9(%arg0: i32) -> (i32, i32) {
    %c0_i32 = arith.constant 0 : i32
    %c0_i32_0 = arith.constant 0 : i32
    %c0_i32_1 = arith.constant 0 : i32
    return %c0_i32, %c0_i32_0 : i32, i32
  }
  func.func @transform_10(%arg0: i32) -> (i32, i32) {
    %c0_i32 = arith.constant 0 : i32
    %c0_i32_0 = arith.constant 0 : i32
    %c0_i32_1 = arith.constant 0 : i32
    return %c0_i32, %c0_i32_0 : i32, i32
  }
  func.func @transform_11(%arg0: i32) -> (i32, i32) {
    %c0_i32 = arith.constant 0 : i32
    %c0_i32_0 = arith.constant 0 : i32
    return %arg0, %c0_i32 : i32, i32
  }
}

</mosaic_0001>

<llo_original>
// kernel: _lambda_.1
$region0: #{_lambda_.1}
  #allocation0 [shape = 'u32[]', space=smem, size = 0x4, offset = 0x4, fixed_abs, tag = 'smem constant byte address 0x4 - core index']
  #allocation1 [shape = 'u32[144,128]{1,0:T(1,128)}', space=vmem, size = 0x12000, scoped, tag = 'internal scratch']
  %s0 = inlined_call_operand.hbm [shape: f32[16,32], index: 0, kind: input, shape index: {}]
  %s1 = inlined_call_operand.hbm [shape: bf16[32,64], index: 1, kind: input, shape index: {}]
  %s2 = inlined_call_operand.hbm [shape: f32[1,64], index: 2, kind: input, shape index: {}]
  %s3 = inlined_call_operand.hbm [shape: bf16[64,64], index: 3, kind: input, shape index: {}]
  %s4 = inlined_call_operand.hbm [shape: f32[1,64], index: 4, kind: input, shape index: {}]
  %s5 = inlined_call_operand.hbm [shape: bf16[64,32], index: 5, kind: input, shape index: {}]
  %s6 = inlined_call_operand.hbm [shape: f32[1,32], index: 6, kind: input, shape index: {}]
  %s7 = inlined_call_operand.hbm [shape: bf16[32,32], index: 7, kind: input, shape index: {}]
  %s8 = inlined_call_operand.hbm [shape: f32[1,32], index: 8, kind: input, shape index: {}]
  %s9 = inlined_call_operand.vmem [shape: bf16[32,8], index: 9, kind: input, shape index: {}]
  %s10 = inlined_call_operand.vmem [shape: f32[1,8], index: 10, kind: input, shape index: {}]
  %s11 = inlined_call_operand.vmem [shape: f32[16,8], index: 11, kind: output, shape index: {}]
  %s12 = sld [smem:[#allocation0]]
  $region90: #{_lambda_.1} parent=0
    _
  %s14 = ssub.s32 1, %s12
  %s15 = scalar_select 0, %s14, %s12
  $region1: #{_lambda_.1} parent=0
    #allocation2 [shape = 'u8[8192]{0}', space=vmem, size = 0x2000, scoped, tag = 'input window, operand 0, single buffered']
    #allocation3 [shape = 's32[1]{0}', space=sflag, size = 0x4, scoped, tag = 'scoped memory for _lambda_.1']
    #allocation4 [shape = 'u8[8192]{0}', space=vmem, size = 0x2000, scoped, tag = 'input window, operand 1, single buffered']
    #allocation5 [shape = 's32[1]{0}', space=sflag, size = 0x4, scoped, tag = 'scoped memory for _lambda_.1']
    #allocation6 [shape = 'u8[512]{0}', space=vmem, size = 0x400, scoped, tag = 'input window, operand 2, single buffered']
    #allocation7 [shape = 'u8[16384]{0}', space=vmem, size = 0x4000, scoped, tag = 'input window, operand 3, single buffered']
    #allocation8 [shape = 's32[1]{0}', space=sflag, size = 0x4, scoped, tag = 'scoped memory for _lambda_.1']
    #allocation9 [shape = 'u8[512]{0}', space=vmem, size = 0x400, scoped, tag = 'input window, operand 4, single buffered']
    #allocation10 [shape = 'u8[16384]{0}', space=vmem, size = 0x4000, scoped, tag = 'input window, operand 5, single buffered']
    #allocation11 [shape = 's32[1]{0}', space=sflag, size = 0x4, scoped, tag = 'scoped memory for _lambda_.1']
    #allocation12 [shape = 'u8[512]{0}', space=vmem, size = 0x400, scoped, tag = 'input window, operand 6, single buffered']
    #allocation13 [shape = 'u8[8192]{0}', space=vmem, size = 0x2000, scoped, tag = 'input window, operand 7, single buffered']
    #allocation14 [shape = 's32[1]{0}', space=sflag, size = 0x4, scoped, tag = 'scoped memory for _lambda_.1']
    #allocation15 [shape = 'u8[512]{0}', space=vmem, size = 0x400, scoped, tag = 'input window, operand 8, single buffered']
    %16 = vsyncpa [#allocation3], 0
    %17 = vsyncpa [#allocation5], 0
    %18 = vsyncpa [#allocation8], 0
    %19 = vsyncpa [#allocation11], 0
    %20 = vsyncpa [#allocation14], 0
    // Predicated region
    $region2: #{_lambda_.1} parent=1 // pred_check
      _
    $region3: #{_lambda_.1} parent=1 // pred_check_branch
      %22 = sbr.rel (0) target = $region5
    $region4: #{_lambda_.1} parent=1 // pred_region
      %s24 = ssub.s32 256, 256
      %25 = vsyncadd [#allocation3], %s24
      %s26 = sshll.u32 [#allocation2], 4
      %s27 = int_to_ptr.vmem [resolvable:$true] %s26
      %32 = dma.hbm_to_vmem [thread:$0]  %s0, 256, %s27, [#allocation3], 128, 128, 8
    $region5: #{_lambda_.1} parent=1 // pred_fallthru
      _
    // Predicated region
    $region6: #{_lambda_.1} parent=1 // pred_check
      _
    $region7: #{_lambda_.1} parent=1 // pred_check_branch
      %34 = sbr.rel (0) target = $region9
    $region8: #{_lambda_.1} parent=1 // pred_region
      %s36 = ssub.s32 256, 256
      %37 = vsyncadd [#allocation5], %s36
      %s38 = sshll.u32 [#allocation4], 4
      %s39 = int_to_ptr.vmem [resolvable:$true] %s38
      %44 = dma.hbm_to_vmem [thread:$0]  %s1, 256, %s39, [#allocation5], 64, 64, 4
    $region9: #{_lambda_.1} parent=1 // pred_fallthru
      _
    // Predicated region
    $region10: #{_lambda_.1} parent=1 // pred_check
      _
    $region11: #{_lambda_.1} parent=1 // pred_check_branch
      %46 = sbr.rel (0) target = $region13
    $region12: #{_lambda_.1} parent=1 // pred_region
      %s48 = ssub.s32 16, 16
      %49 = vsyncadd [#allocation5], %s48
      %s51 = sshll.u32 [#allocation6], 4
      %s52 = int_to_ptr.vmem [resolvable:$true] %s51
      %54 = dma.hbm_to_vmem [thread:$0]  %s2, 16, %s52, [#allocation5]
    $region13: #{_lambda_.1} parent=1 // pred_fallthru
      _
    // Predicated region
    $region14: #{_lambda_.1} parent=1 // pred_check
      _
    $region15: #{_lambda_.1} parent=1 // pred_check_branch
      %56 = sbr.rel (0) target = $region17
    $region16: #{_lambda_.1} parent=1 // pred_region
      %s58 = ssub.s32 512, 512
      %59 = vsyncadd [#allocation8], %s58
      %s60 = sshll.u32 [#allocation7], 4
      %s61 = int_to_ptr.vmem [resolvable:$true] %s60
      %66 = dma.hbm_to_vmem [thread:$0]  %s3, 512, %s61, [#allocation8], 64, 64, 4
    $region17: #{_lambda_.1} parent=1 // pred_fallthru
      _
    // Predicated region
    $region18: #{_lambda_.1} parent=1 // pred_check
      _
    $region19: #{_lambda_.1} parent=1 // pred_check_branch
      %68 = sbr.rel (0) target = $region21
    $region20: #{_lambda_.1} parent=1 // pred_region
      %s70 = ssub.s32 16, 16
      %71 = vsyncadd [#allocation8], %s70
      %s73 = sshll.u32 [#allocation9], 4
      %s74 = int_to_ptr.vmem [resolvable:$true] %s73
      %76 = dma.hbm_to_vmem [thread:$0]  %s4, 16, %s74, [#allocation8]
    $region21: #{_lambda_.1} parent=1 // pred_fallthru
      _
    // Predicated region
    $region22: #{_lambda_.1} parent=1 // pred_check
      _
    $region23: #{_lambda_.1} parent=1 // pred_check_branch
      %78 = sbr.rel (0) target = $region25
    $region24: #{_lambda_.1} parent=1 // pred_region
      %s80 = ssub.s32 512, 512
      %81 = vsyncadd [#allocation11], %s80
      %s82 = sshll.u32 [#allocation10], 4
      %s83 = int_to_ptr.vmem [resolvable:$true] %s82
      %88 = dma.hbm_to_vmem [thread:$0]  %s5, 512, %s83, [#allocation11], 64, 64, 4
    $region25: #{_lambda_.1} parent=1 // pred_fallthru
      _
    // Predicated region
    $region26: #{_lambda_.1} parent=1 // pred_check
      _
    $region27: #{_lambda_.1} parent=1 // pred_check_branch
      %90 = sbr.rel (0) target = $region29
    $region28: #{_lambda_.1} parent=1 // pred_region
      %s92 = ssub.s32 16, 16
      %93 = vsyncadd [#allocation11], %s92
      %s95 = sshll.u32 [#allocation12], 4
      %s96 = int_to_ptr.vmem [resolvable:$true] %s95
      %98 = dma.hbm_to_vmem [thread:$0]  %s6, 16, %s96, [#allocation11]
    $region29: #{_lambda_.1} parent=1 // pred_fallthru
      _
    // Predicated region
    $region30: #{_lambda_.1} parent=1 // pred_check
      _
    $region31: #{_lambda_.1} parent=1 // pred_check_branch
      %100 = sbr.rel (0) target = $region33
    $region32: #{_lambda_.1} parent=1 // pred_region
      %s102 = ssub.s32 256, 256
      %103 = vsyncadd [#allocation14], %s102
      %s104 = sshll.u32 [#allocation13], 4
      %s105 = int_to_ptr.vmem [resolvable:$true] %s104
      %110 = dma.hbm_to_vmem [thread:$0]  %s7, 256, %s105, [#allocation14], 64, 64, 4
    $region33: #{_lambda_.1} parent=1 // pred_fallthru
      _
    // Predicated region
    $region34: #{_lambda_.1} parent=1 // pred_check
      _
    $region35: #{_lambda_.1} parent=1 // pred_check_branch
      %112 = sbr.rel (0) target = $region37
    $region36: #{_lambda_.1} parent=1 // pred_region
      %s114 = ssub.s32 16, 16
      %115 = vsyncadd [#allocation14], %s114
      %s117 = sshll.u32 [#allocation15], 4
      %s118 = int_to_ptr.vmem [resolvable:$true] %s117
      %120 = dma.hbm_to_vmem [thread:$0]  %s8, 16, %s118, [#allocation14]
    $region37: #{_lambda_.1} parent=1 // pred_fallthru
      _
    // Predicated region
    $region38: #{_lambda_.1} parent=1 // pred_check
      _
    $region39: #{_lambda_.1} parent=1 // pred_check_branch
      %122 = sbr.rel (0) target = $region41
    $region40: #{_lambda_.1} parent=1 // pred_region
      _
    $region41: #{_lambda_.1} parent=1 // pred_fallthru
      _
    // Predicated region
    $region42: #{_lambda_.1} parent=1 // pred_check
      _
    $region43: #{_lambda_.1} parent=1 // pred_check_branch
      %124 = sbr.rel (0) target = $region45
    $region44: #{_lambda_.1} parent=1 // pred_region
      _
    $region45: #{_lambda_.1} parent=1 // pred_fallthru
      _
    // Predicated region
    $region46: #{_lambda_.1} parent=1 // pred_check
      _
    $region47: #{_lambda_.1} parent=1 // pred_check_branch
      %126 = sbr.rel (0) target = $region49
    $region48: #{_lambda_.1} parent=1 // pred_region
      %127 = dma.done [#allocation3], 256
    $region49: #{_lambda_.1} parent=1 // pred_fallthru
      _
    // Predicated region
    $region50: #{_lambda_.1} parent=1 // pred_check
      _
    $region51: #{_lambda_.1} parent=1 // pred_check_branch
      %129 = sbr.rel (0) target = $region53
    $region52: #{_lambda_.1} parent=1 // pred_region
      %130 = dma.done [#allocation5], 256
    $region53: #{_lambda_.1} parent=1 // pred_fallthru
      _
    // Predicated region
    $region54: #{_lambda_.1} parent=1 // pred_check
      _
    $region55: #{_lambda_.1} parent=1 // pred_check_branch
      %132 = sbr.rel (0) target = $region57
    $region56: #{_lambda_.1} parent=1 // pred_region
      %133 = dma.done [#allocation5], 16
    $region57: #{_lambda_.1} parent=1 // pred_fallthru
      _
    // Predicated region
    $region58: #{_lambda_.1} parent=1 // pred_check
      _
    $region59: #{_lambda_.1} parent=1 // pred_check_branch
      %135 = sbr.rel (0) target = $region61
    $region60: #{_lambda_.1} parent=1 // pred_region
      %136 = dma.done [#allocation8], 512
    $region61: #{_lambda_.1} parent=1 // pred_fallthru
      _
    // Predicated region
    $region62: #{_lambda_.1} parent=1 // pred_check
      _
    $region63: #{_lambda_.1} parent=1 // pred_check_branch
      %138 = sbr.rel (0) target = $region65
    $region64: #{_lambda_.1} parent=1 // pred_region
      %139 = dma.done [#allocation8], 16
    $region65: #{_lambda_.1} parent=1 // pred_fallthru
      _
    // Predicated region
    $region66: #{_lambda_.1} parent=1 // pred_check
      _
    $region67: #{_lambda_.1} parent=1 // pred_check_branch
      %141 = sbr.rel (0) target = $region69
    $region68: #{_lambda_.1} parent=1 // pred_region
      %142 = dma.done [#allocation11], 512
    $region69: #{_lambda_.1} parent=1 // pred_fallthru
      _
    // Predicated region
    $region70: #{_lambda_.1} parent=1 // pred_check
      _
    $region71: #{_lambda_.1} parent=1 // pred_check_branch
      %144 = sbr.rel (0) target = $region73
    $region72: #{_lambda_.1} parent=1 // pred_region
      %145 = dma.done [#allocation11], 16
    $region73: #{_lambda_.1} parent=1 // pred_fallthru
      _
    // Predicated region
    $region74: #{_lambda_.1} parent=1 // pred_check
      _
    $region75: #{_lambda_.1} parent=1 // pred_check_branch
      %147 = sbr.rel (0) target = $region77
    $region76: #{_lambda_.1} parent=1 // pred_region
      %148 = dma.done [#allocation14], 256
    $region77: #{_lambda_.1} parent=1 // pred_fallthru
      _
    // Predicated region
    $region78: #{_lambda_.1} parent=1 // pred_check
      _
    $region79: #{_lambda_.1} parent=1 // pred_check_branch
      %150 = sbr.rel (0) target = $region81
    $region80: #{_lambda_.1} parent=1 // pred_region
      %151 = dma.done [#allocation14], 16
    $region81: #{_lambda_.1} parent=1 // pred_fallthru
      _
    %v153 = vld [vmem:[#allocation2] sm:$0xff]
    %v154 = vld [vmem:[#allocation2 + $0x8] sm:$0xff]
    %v155 = vpack.c.bf16 %v154, %v153
    %v156 = vld [vmem:[#allocation4] sm:$0xf]
    %v157 = vld [vmem:[#allocation4 + $0x4] sm:$0xf]
    %v158 = vld [vmem:[#allocation4 + $0x8] sm:$0xf]
    %v159 = vld [vmem:[#allocation4 + $0xc] sm:$0xf]
    %v160 = vld [vmem:[#allocation6] sm:$0x1]
    %v162 = vlaneseq
    %v163 = vshrl.u32 %v162, 7
    %v164 = vsub.s32 0, %v163
    %v165 = vrot.slane %v160, %v164
    %v171 = vunpack.c.l.b16 %v156
    %v172 = vunpack.c.l.b16 %v157
    %v173 = vunpack.c.l.b16 %v158
    %v174 = vunpack.c.l.b16 %v159
    %v175 = vpack.c.b16 %v172, %v171
    %v176 = vpack.c.b16 %v174, %v173
    %vm179 = vcmask 261120
    %v181 = vsel %vm179, %v155, 0
    %183 = vmatprep.subr.bf16.mxu0 0
    %184 = vmatpush1.bf16.msra.mxu0 0
    %185 = vmatprep.subr.bf16.mxu0 0
    %186 = vmatpush1.bf16.msra.mxu0 0
    %187 = vmatprep.subr.bf16.mxu0 0
    %188 = vmatpush1.bf16.msra.mxu0 0
    %189 = vmatprep.subr.bf16.mxu0 0
    %190 = vmatpush1.bf16.msra.mxu0 0
    %191 = vmatprep.subr.bf16.mxu0 0
    %192 = vmatpush1.bf16.msra.mxu0 0
    %193 = vmatprep.subr.bf16.mxu0 0
    %194 = vmatpush1.bf16.msra.mxu0 0
    %195 = vmatprep.subr.bf16.mxu0 0
    %196 = vmatpush1.bf16.msra.mxu0 %v176
    %197 = vmatprep.subr.bf16.mxu0 0
    %198 = vmatpush1.bf16.msra.mxu0 %v175
    %199 = vmatprep.subr.bf16.mxu0 0
    %200 = vmatpush2.bf16.msra.mxu0 0
    %201 = vmatprep.subr.bf16.mxu0 0
    %202 = vmatpush2.bf16.msra.mxu0 0
    %203 = vmatprep.subr.bf16.mxu0 0
    %204 = vmatpush2.bf16.msra.mxu0 0
    %205 = vmatprep.subr.bf16.mxu0 0
    %206 = vmatpush2.bf16.msra.mxu0 0
    %207 = vmatprep.subr.bf16.mxu0 0
    %208 = vmatpush2.bf16.msra.mxu0 0
    %209 = vmatprep.subr.bf16.mxu0 0
    %210 = vmatpush2.bf16.msra.mxu0 0
    %211 = vmatprep.subr.bf16.mxu0 0
    %212 = vmatpush2.bf16.msra.mxu0 0
    %213 = vmatprep.subr.bf16.mxu0 0
    %214 = vmatpush2.bf16.msra.mxu0 0
    %215 = vmatprep.mubr.bf16.mxu0 0
    %216 = vmatmul.mubr.bf16.gmra.mxu0 %v181
    %v217 = vpop.f32.mrf.mxu0
    %v218 = vadd.f32 %v165, %v217
    %v219 = vpop.f32.mrf.mxu0
    %v220 = vpop.f32.mrf.mxu0
    %v221 = vadd.f32 %v165, %v220
    %v222 = vpop.f32.mrf.mxu0
    %223 = vdwg.mxu0
    %v224 = vmax.f32 %v218, 0.0
    %v225 = vmax.f32 %v221, 0.0
    %v226 = vpack.c.bf16 %v225, %v224
    %v227 = vld [vmem:[#allocation7] sm:$0xf]
    %v228 = vld [vmem:[#allocation7 + $0x4] sm:$0xf]
    %v229 = vld [vmem:[#allocation7 + $0x8] sm:$0xf]
    %v230 = vld [vmem:[#allocation7 + $0xc] sm:$0xf]
    %v231 = vld [vmem:[#allocation7 + $0x10] sm:$0xf]
    %v232 = vld [vmem:[#allocation7 + $0x14] sm:$0xf]
    %v233 = vld [vmem:[#allocation7 + $0x18] sm:$0xf]
    %v234 = vld [vmem:[#allocation7 + $0x1c] sm:$0xf]
    %v235 = vld [vmem:[#allocation9] sm:$0x1]
    %v237 = vlaneseq
    %v238 = vshrl.u32 %v237, 7
    %v239 = vsub.s32 0, %v238
    %v240 = vrot.slane %v235, %v239
    %v250 = vunpack.c.l.b16 %v227
    %v251 = vunpack.c.l.b16 %v228
    %v252 = vunpack.c.l.b16 %v229
    %v253 = vunpack.c.l.b16 %v230
    %v254 = vunpack.c.l.b16 %v231
    %v255 = vunpack.c.l.b16 %v232
    %v256 = vunpack.c.l.b16 %v233
    %v257 = vunpack.c.l.b16 %v234
    %v258 = vpack.c.b16 %v251, %v250
    %v259 = vpack.c.b16 %v253, %v252
    %v260 = vpack.c.b16 %v255, %v254
    %v261 = vpack.c.b16 %v257, %v256
    %vm266 = vcmask 523264
    %v268 = vsel %vm266, %v226, 0
    %270 = vmatprep.subr.bf16.mxu0 0
    %271 = vmatpush1.bf16.msra.mxu0 0
    %272 = vmatprep.subr.bf16.mxu0 0
    %273 = vmatpush1.bf16.msra.mxu0 0
    %274 = vmatprep.subr.bf16.mxu0 0
    %275 = vmatpush1.bf16.msra.mxu0 0
    %276 = vmatprep.subr.bf16.mxu0 0
    %277 = vmatpush1.bf16.msra.mxu0 0
    %278 = vmatprep.subr.bf16.mxu0 0
    %279 = vmatpush1.bf16.msra.mxu0 %v261
    %280 = vmatprep.subr.bf16.mxu0 0
    %281 = vmatpush1.bf16.msra.mxu0 %v260
    %282 = vmatprep.subr.bf16.mxu0 0
    %283 = vmatpush1.bf16.msra.mxu0 %v259
    %284 = vmatprep.subr.bf16.mxu0 0
    %285 = vmatpush1.bf16.msra.mxu0 %v258
    %286 = vmatprep.subr.bf16.mxu0 0
    %287 = vmatpush2.bf16.msra.mxu0 0
    %288 = vmatprep.subr.bf16.mxu0 0
    %289 = vmatpush2.bf16.msra.mxu0 0
    %290 = vmatprep.subr.bf16.mxu0 0
    %291 = vmatpush2.bf16.msra.mxu0 0
    %292 = vmatprep.subr.bf16.mxu0 0
    %293 = vmatpush2.bf16.msra.mxu0 0
    %294 = vmatprep.subr.bf16.mxu0 0
    %295 = vmatpush2.bf16.msra.mxu0 0
    %296 = vmatprep.subr.bf16.mxu0 0
    %297 = vmatpush2.bf16.msra.mxu0 0
    %298 = vmatprep.subr.bf16.mxu0 0
    %299 = vmatpush2.bf16.msra.mxu0 0
    %300 = vmatprep.subr.bf16.mxu0 0
    %301 = vmatpush2.bf16.msra.mxu0 0
    %302 = vmatprep.mubr.bf16.mxu0 0
    %303 = vmatmul.mubr.bf16.gmra.mxu0 %v268
    %v304 = vpop.f32.mrf.mxu0
    %v305 = vadd.f32 %v240, %v304
    %v306 = vpop.f32.mrf.mxu0
    %v307 = vpop.f32.mrf.mxu0
    %v308 = vadd.f32 %v240, %v307
    %v309 = vpop.f32.mrf.mxu0
    %310 = vdwg.mxu0
    %v311 = vmax.f32 %v305, 0.0
    %v312 = vmax.f32 %v308, 0.0
    %v313 = vpack.c.bf16 %v312, %v311
    %v314 = vld [vmem:[#allocation10] sm:$0xf]
    %v315 = vld [vmem:[#allocation10 + $0x4] sm:$0xf]
    %v316 = vld [vmem:[#allocation10 + $0x8] sm:$0xf]
    %v317 = vld [vmem:[#allocation10 + $0xc] sm:$0xf]
    %v318 = vld [vmem:[#allocation10 + $0x10] sm:$0xf]
    %v319 = vld [vmem:[#allocation10 + $0x14] sm:$0xf]
    %v320 = vld [vmem:[#allocation10 + $0x18] sm:$0xf]
    %v321 = vld [vmem:[#allocation10 + $0x1c] sm:$0xf]
    %v322 = vld [vmem:[#allocation12] sm:$0x1]
    %v324 = vlaneseq
    %v325 = vshrl.u32 %v324, 7
    %v326 = vsub.s32 0, %v325
    %v327 = vrot.slane %v322, %v326
    %v337 = vunpack.c.l.b16 %v314
    %v338 = vunpack.c.l.b16 %v315
    %v339 = vunpack.c.l.b16 %v316
    %v340 = vunpack.c.l.b16 %v317
    %v341 = vunpack.c.l.b16 %v318
    %v342 = vunpack.c.l.b16 %v319
    %v343 = vunpack.c.l.b16 %v320
    %v344 = vunpack.c.l.b16 %v321
    %v345 = vpack.c.b16 %v338, %v337
    %v346 = vpack.c.b16 %v340, %v339
    %v347 = vpack.c.b16 %v342, %v341
    %v348 = vpack.c.b16 %v344, %v343
    %v354 = vsel %vm266, %v313, 0
    %356 = vmatprep.subr.bf16.mxu0 0
    %357 = vmatpush1.bf16.msra.mxu0 0
    %358 = vmatprep.subr.bf16.mxu0 0
    %359 = vmatpush1.bf16.msra.mxu0 0
    %360 = vmatprep.subr.bf16.mxu0 0
    %361 = vmatpush1.bf16.msra.mxu0 0
    %362 = vmatprep.subr.bf16.mxu0 0
    %363 = vmatpush1.bf16.msra.mxu0 0
    %364 = vmatprep.subr.bf16.mxu0 0
    %365 = vmatpush1.bf16.msra.mxu0 %v348
    %366 = vmatprep.subr.bf16.mxu0 0
    %367 = vmatpush1.bf16.msra.mxu0 %v347
    %368 = vmatprep.subr.bf16.mxu0 0
    %369 = vmatpush1.bf16.msra.mxu0 %v346
    %370 = vmatprep.subr.bf16.mxu0 0
    %371 = vmatpush1.bf16.msra.mxu0 %v345
    %372 = vmatprep.subr.bf16.mxu0 0
    %373 = vmatpush2.bf16.msra.mxu0 0
    %374 = vmatprep.subr.bf16.mxu0 0
    %375 = vmatpush2.bf16.msra.mxu0 0
    %376 = vmatprep.subr.bf16.mxu0 0
    %377 = vmatpush2.bf16.msra.mxu0 0
    %378 = vmatprep.subr.bf16.mxu0 0
    %379 = vmatpush2.bf16.msra.mxu0 0
    %380 = vmatprep.subr.bf16.mxu0 0
    %381 = vmatpush2.bf16.msra.mxu0 0
    %382 = vmatprep.subr.bf16.mxu0 0
    %383 = vmatpush2.bf16.msra.mxu0 0
    %384 = vmatprep.subr.bf16.mxu0 0
    %385 = vmatpush2.bf16.msra.mxu0 0
    %386 = vmatprep.subr.bf16.mxu0 0
    %387 = vmatpush2.bf16.msra.mxu0 0
    %388 = vmatprep.mubr.bf16.mxu0 0
    %389 = vmatmul.mubr.bf16.gmra.mxu0 %v354
    %v390 = vpop.f32.mrf.mxu0
    %v391 = vadd.f32 %v327, %v390
    %v392 = vpop.f32.mrf.mxu0
    %v393 = vpop.f32.mrf.mxu0
    %v394 = vadd.f32 %v327, %v393
    %v395 = vpop.f32.mrf.mxu0
    %396 = vdwg.mxu0
    %v397 = vmax.f32 %v391, 0.0
    %v398 = vmax.f32 %v394, 0.0
    %v399 = vpack.c.bf16 %v398, %v397
    %v400 = vld [vmem:[#allocation13] sm:$0xf]
    %v401 = vld [vmem:[#allocation13 + $0x4] sm:$0xf]
    %v402 = vld [vmem:[#allocation13 + $0x8] sm:$0xf]
    %v403 = vld [vmem:[#allocation13 + $0xc] sm:$0xf]
    %v404 = vld [vmem:[#allocation15] sm:$0x1]
    %v406 = vlaneseq
    %v407 = vshrl.u32 %v406, 7
    %v408 = vsub.s32 0, %v407
    %v409 = vrot.slane %v404, %v408
    %v415 = vunpack.c.l.b16 %v400
    %v416 = vunpack.c.l.b16 %v401
    %v417 = vunpack.c.l.b16 %v402
    %v418 = vunpack.c.l.b16 %v403
    %v419 = vpack.c.b16 %v416, %v415
    %v420 = vpack.c.b16 %v418, %v417
    %v424 = vsel %vm179, %v399, 0
    %426 = vmatprep.subr.bf16.mxu0 0
    %427 = vmatpush1.bf16.msra.mxu0 0
    %428 = vmatprep.subr.bf16.mxu0 0
    %429 = vmatpush1.bf16.msra.mxu0 0
    %430 = vmatprep.subr.bf16.mxu0 0
    %431 = vmatpush1.bf16.msra.mxu0 0
    %432 = vmatprep.subr.bf16.mxu0 0
    %433 = vmatpush1.bf16.msra.mxu0 0
    %434 = vmatprep.subr.bf16.mxu0 0
    %435 = vmatpush1.bf16.msra.mxu0 0
    %436 = vmatprep.subr.bf16.mxu0 0
    %437 = vmatpush1.bf16.msra.mxu0 0
    %438 = vmatprep.subr.bf16.mxu0 0
    %439 = vmatpush1.bf16.msra.mxu0 %v420
    %440 = vmatprep.subr.bf16.mxu0 0
    %441 = vmatpush1.bf16.msra.mxu0 %v419
    %442 = vmatprep.subr.bf16.mxu0 0
    %443 = vmatpush2.bf16.msra.mxu0 0
    %444 = vmatprep.subr.bf16.mxu0 0
    %445 = vmatpush2.bf16.msra.mxu0 0
    %446 = vmatprep.subr.bf16.mxu0 0
    %447 = vmatpush2.bf16.msra.mxu0 0
    %448 = vmatprep.subr.bf16.mxu0 0
    %449 = vmatpush2.bf16.msra.mxu0 0
    %450 = vmatprep.subr.bf16.mxu0 0
    %451 = vmatpush2.bf16.msra.mxu0 0
    %452 = vmatprep.subr.bf16.mxu0 0
    %453 = vmatpush2.bf16.msra.mxu0 0
    %454 = vmatprep.subr.bf16.mxu0 0
    %455 = vmatpush2.bf16.msra.mxu0 0
    %456 = vmatprep.subr.bf16.mxu0 0
    %457 = vmatpush2.bf16.msra.mxu0 0
    %458 = vmatprep.mubr.bf16.mxu0 0
    %459 = vmatmul.mubr.bf16.gmra.mxu0 %v424
    %v460 = vpop.f32.mrf.mxu0
    %v461 = vadd.f32 %v409, %v460
    %v462 = vpop.f32.mrf.mxu0
    %v463 = vpop.f32.mrf.mxu0
    %v464 = vadd.f32 %v409, %v463
    %v465 = vpop.f32.mrf.mxu0
    %466 = vdwg.mxu0
    %v467 = vmax.f32 %v461, 0.0
    %v468 = vmax.f32 %v464, 0.0
    %v469 = vpack.c.bf16 %v468, %v467
    %v470 = vld [vmem:[%s9] sm:$0xf]
    %v471 = vld [vmem:[%s9 + $0x4] sm:$0xf]
    %v472 = vld [vmem:[%s9 + $0x8] sm:$0xf]
    %v473 = vld [vmem:[%s9 + $0xc] sm:$0xf]
    %v474 = vld [vmem:[%s10] sm:$0x1]
    %v476 = vlaneseq
    %v477 = vshrl.u32 %v476, 7
    %v478 = vsub.s32 0, %v477
    %v479 = vrot.slane %v474, %v478
    %v485 = vunpack.c.l.b16 %v470
    %v486 = vunpack.c.l.b16 %v471
    %v487 = vunpack.c.l.b16 %v472
    %v488 = vunpack.c.l.b16 %v473
    %v489 = vpack.c.b16 %v486, %v485
    %v490 = vpack.c.b16 %v488, %v487
    %v494 = vsel %vm179, %v469, 0
    %496 = vmatprep.subr.bf16.mxu0 0
    %497 = vmatpush1.bf16.msra.mxu0 0
    %498 = vmatprep.subr.bf16.mxu0 0
    %499 = vmatpush1.bf16.msra.mxu0 0
    %500 = vmatprep.subr.bf16.mxu0 0
    %501 = vmatpush1.bf16.msra.mxu0 0
    %502 = vmatprep.subr.bf16.mxu0 0
    %503 = vmatpush1.bf16.msra.mxu0 0
    %504 = vmatprep.subr.bf16.mxu0 0
    %505 = vmatpush1.bf16.msra.mxu0 0
    %506 = vmatprep.subr.bf16.mxu0 0
    %507 = vmatpush1.bf16.msra.mxu0 0
    %508 = vmatprep.subr.bf16.mxu0 0
    %509 = vmatpush1.bf16.msra.mxu0 %v490
    %510 = vmatprep.subr.bf16.mxu0 0
    %511 = vmatpush1.bf16.msra.mxu0 %v489
    %512 = vmatprep.subr.bf16.mxu0 0
    %513 = vmatpush2.bf16.msra.mxu0 0
    %514 = vmatprep.subr.bf16.mxu0 0
    %515 = vmatpush2.bf16.msra.mxu0 0
    %516 = vmatprep.subr.bf16.mxu0 0
    %517 = vmatpush2.bf16.msra.mxu0 0
    %518 = vmatprep.subr.bf16.mxu0 0
    %519 = vmatpush2.bf16.msra.mxu0 0
    %520 = vmatprep.subr.bf16.mxu0 0
    %521 = vmatpush2.bf16.msra.mxu0 0
    %522 = vmatprep.subr.bf16.mxu0 0
    %523 = vmatpush2.bf16.msra.mxu0 0
    %524 = vmatprep.subr.bf16.mxu0 0
    %525 = vmatpush2.bf16.msra.mxu0 0
    %526 = vmatprep.subr.bf16.mxu0 0
    %527 = vmatpush2.bf16.msra.mxu0 0
    %528 = vmatprep.mubr.bf16.mxu0 0
    %529 = vmatmul.mubr.bf16.gmra.mxu0 %v494
    %v530 = vpop.f32.mrf.mxu0
    %v531 = vadd.f32 %v479, %v530
    %v532 = vpop.f32.mrf.mxu0
    %v533 = vpop.f32.mrf.mxu0
    %v534 = vadd.f32 %v479, %v533
    %v535 = vpop.f32.mrf.mxu0
    %536 = vdwg.mxu0
    %v537 = vxor.u32 %v531, 2147483648
    %v538 = vxor.u32 %v534, 2147483648
    %v539 = vmul.f32 %v537, 1.442695
    %v540 = vpow.pop %v539
    %v541 = vmul.f32 %v538, 1.442695
    %v542 = vpow.pop %v541
    %v543 = vadd.f32 %v540, 1.0
    %v544 = vadd.f32 %v542, 1.0
    %v545 = vrcp.pop %v543
    %v546 = vmul.f32 1.0, %v545
    %v547 = vrcp.pop %v544
    %v548 = vmul.f32 1.0, %v547
    %vm549 = vcmask 64512
    %550 = vst.msk [vmem:[%s11] sm:$0xff] %vm549, %v546
    %551 = vst.msk [vmem:[%s11 + $0x8] sm:$0xff] %vm549, %v548
    // Predicated region
    $region82: #{_lambda_.1} parent=1 // pred_check
      _
    $region83: #{_lambda_.1} parent=1 // pred_check_branch
      %553 = sbr.rel (0) target = $region85
    $region84: #{_lambda_.1} parent=1 // pred_region
      _
    $region85: #{_lambda_.1} parent=1 // pred_fallthru
      _
    // Predicated region
    $region86: #{_lambda_.1} parent=1 // pred_check
      _
    $region87: #{_lambda_.1} parent=1 // pred_check_branch
      %555 = sbr.rel (0) target = $region89
    $region88: #{_lambda_.1} parent=1 // pred_region
      _
    $region89: #{_lambda_.1} parent=1 // pred_fallthru
      _
    %556 = vsyncpa [#allocation3], 1
    %557 = vsyncpa [#allocation5], 1
    %558 = vsyncpa [#allocation8], 1
    %559 = vsyncpa [#allocation11], 1
    %560 = vsyncpa [#allocation14], 1

</llo_original>
